<compile_context>
chip_gen: v7x
topology: tpu7x:2x2x1
jax: 0.10.0
libtpu: 0.0.40
codegen_flags: <defaults>
</compile_context>

<pallas_src>
import jax
import jax.numpy as jnp
from jax.experimental import pallas as pl
from jax.experimental.pallas import tpu as pltpu

LANE = 128


def _round_up(n: int, m: int) -> int:
    return ((n + m - 1) // m) * m


def make_nbeats_kernel(n_layers: int):
    """Kernel computing the full MLP stack + theta projection for one batch tile."""

    def kernel(*refs):
        # refs = (x, w0, ..., w_{L-1}, biases, w_theta, theta_out)
        x_ref = refs[0]
        w_refs = refs[1:1 + n_layers]
        b_ref = refs[1 + n_layers]          # (n_layers, width_p) f32
        wt_ref = refs[2 + n_layers]         # (width_p, theta_p) bf16
        theta_ref = refs[3 + n_layers]      # (tb, theta_p) f32

        h = x_ref[...]                      # bf16 (tb, in_p)
        for i in range(n_layers):           # static unroll (n_layers is Python int)
            acc = jnp.dot(h, w_refs[i][...], preferred_element_type=jnp.float32)
            acc = acc + b_ref[i:i + 1, :]   # f32 bias row, broadcast over batch tile
            # ReLU in f32, then back to the compute dtype for the next MXU op.
            h = jnp.maximum(acc, 0.0).astype(x_ref.dtype)

        theta_ref[...] = jnp.dot(
            h, wt_ref[...], preferred_element_type=jnp.float32
        ).astype(theta_ref.dtype)

    return kernel


def nbeats_block(x, layer_weights, layer_biases, theta_weight, input_size, forecast_size,
                 *, batch_tile: int = 512, compute_dtype=jnp.bfloat16):
    """NBeatsBlock forward: x -> (backcast, forecast) via a single Pallas call.

    layer_weights[i]: (in_dim, layer_width); layer_biases[i]: (1, layer_width) or (layer_width,)
    theta_weight: (layer_width, theta_size) with theta_size = input_size + forecast_size.
    """
    batch = x.shape[0]
    n_layers = len(layer_weights)
    layer_width = layer_weights[0].shape[1]
    theta_size = theta_weight.shape[1]
    assert theta_size == input_size + forecast_size

    # Lane-friendly padded feature dims.
    in_p = _round_up(input_size, LANE)
    width_p = _round_up(layer_width, LANE)
    theta_p = _round_up(theta_size, LANE)

    # Batch tiling: big tiles for real batches, clamp for tiny smoke tests.
    tb = min(batch_tile, _round_up(batch, 8))
    batch_p = _round_up(batch, tb)
    grid = (batch_p // tb,)

    # --- zero-pad & cast parameters (padded rows/cols are zero => exact) ---
    x_p = jnp.zeros((batch_p, in_p), compute_dtype)
    x_p = x_p.at[:batch, :input_size].set(x.astype(compute_dtype))

    ws = []
    in_dims = []
    prev_p = in_p
    for w in layer_weights:
        w_pad = jnp.zeros((prev_p, width_p), compute_dtype)
        w_pad = w_pad.at[:w.shape[0], :w.shape[1]].set(w.astype(compute_dtype))
        ws.append(w_pad)
        in_dims.append(prev_p)
        prev_p = width_p

    # All biases consolidated into one f32 (n_layers, width_p) array.
    biases = jnp.zeros((n_layers, width_p), jnp.float32)
    for l, b in enumerate(layer_biases):
        biases = biases.at[l, :layer_width].set(jnp.reshape(b, (-1,)).astype(jnp.float32))

    wt_p = jnp.zeros((width_p, theta_p), compute_dtype)
    wt_p = wt_p.at[:layer_width, :theta_size].set(theta_weight.astype(compute_dtype))

    # --- block specs: stream x/theta over the batch grid, weights resident ---
    in_specs = (
        [pl.BlockSpec((tb, in_p), lambda i: (i, 0))]
        + [pl.BlockSpec((in_dims[l], width_p), lambda i: (0, 0)) for l in range(n_layers)]
        + [pl.BlockSpec((n_layers, width_p), lambda i: (0, 0)),
           pl.BlockSpec((width_p, theta_p), lambda i: (0, 0))]
    )
    out_specs = pl.BlockSpec((tb, theta_p), lambda i: (i, 0))

    # --- VMEM budget (double-buffered streamed tiles + resident params) ---
    bpe = jnp.dtype(compute_dtype).itemsize
    vmem_bytes = (
        2 * tb * in_p * bpe                          # x tiles (double-buffered)
        + 2 * tb * theta_p * 4                       # theta out tiles (f32, double-buffered)
        + sum(d * width_p for d in in_dims) * bpe    # layer weights (resident)
        + n_layers * width_p * 4                     # biases (f32)
        + width_p * theta_p * bpe                    # theta weight
        + 2 * tb * width_p * 4                       # f32 activation working set
    )
    vmem_limit = min(128 * 1024 * 1024, int(vmem_bytes * 2) + (16 << 20))

    # Advisory cost estimate so XLA schedules around the custom call sensibly.
    flops = 2 * batch_p * (
        in_p * width_p + (n_layers - 1) * width_p * width_p + width_p * theta_p
    )
    bytes_accessed = int(
        batch_p * in_p * bpe + batch_p * theta_p * 4
        + sum(d * width_p for d in in_dims) * bpe
        + n_layers * width_p * 4 + width_p * theta_p * bpe
    )

    theta = pl.pallas_call(
        make_nbeats_kernel(n_layers),
        out_shape=jax.ShapeDtypeStruct((batch_p, theta_p), jnp.float32),
        grid=grid,
        in_specs=in_specs,
        out_specs=out_specs,
        compiler_params=pltpu.CompilerParams(
            dimension_semantics=("parallel",),
            vmem_limit_bytes=vmem_limit,
        ),
        cost_estimate=pl.CostEstimate(
            flops=flops, transcendentals=0, bytes_accessed=bytes_accessed
        ),
    )(x_p, *ws, biases, wt_p)

    # Strip padding; GenericBasis split done cheaply in the wrapper.
    theta = theta[:batch, :theta_size].astype(x.dtype)
    return theta[:, :input_size], theta[:, input_size:]


def nbeats_block_ref(x, layer_weights, layer_biases, theta_weight, input_size,
                     compute_dtype=jnp.bfloat16):
    """Pure-JAX reference mirroring the kernel's precision (bf16 matmul inputs, f32 accum)."""
    h = x.astype(compute_dtype)
    for w, b in zip(layer_weights, layer_biases):
        acc = jnp.dot(h, w.astype(compute_dtype), preferred_element_type=jnp.float32)
        acc = acc + jnp.reshape(b, (1, -1)).astype(jnp.float32)
        h = jnp.maximum(acc, 0.0).astype(compute_dtype)
    theta = jnp.dot(h, theta_weight.astype(compute_dtype),
                    preferred_element_type=jnp.float32).astype(x.dtype)
    return theta[:, :input_size], theta[:, input_size:]


if __name__ == "__main__":
    # Small shapes consistent with the module: univariate time-series block.
    batch = 8
    input_size = 8        # backcast length
    forecast_size = 4     # forecast length
    theta_size = input_size + forecast_size
    n_layers = 3
    layer_width = 32

    key = jax.random.PRNGKey(0)
    keys = jax.random.split(key, 2 * n_layers + 2)

    # Deterministic parameter init (synthetic, not a checkpoint load).
    layer_weights = []
    layer_biases = []
    in_dim = input_size
    for i in range(n_layers):
        w = 0.1 * jax.random.normal(keys[2 * i], (in_dim, layer_width), dtype=jnp.float32)
        b = 0.1 * jax.random.normal(keys[2 * i + 1], (1, layer_width), dtype=jnp.float32)
        layer_weights.append(w)
        layer_biases.append(b)
        in_dim = layer_width
    theta_weight = 0.1 * jax.random.normal(
        keys[2 * n_layers], (layer_width, theta_size), dtype=jnp.float32
    )

    x = jax.random.normal(keys[2 * n_layers + 1], (batch, input_size), dtype=jnp.float32)

    backcast, forecast = nbeats_block(
        x, layer_weights, layer_biases, theta_weight, input_size, forecast_size
    )
    jax.block_until_ready((backcast, forecast))

    # Verify against a precision-matched pure-JAX reference.
    bc_ref, fc_ref = nbeats_block_ref(x, layer_weights, layer_biases, theta_weight, input_size)
    assert backcast.shape == (batch, input_size)
    assert forecast.shape == (batch, forecast_size)
    assert jnp.allclose(backcast, bc_ref, atol=1e-3, rtol=1e-2)
    assert jnp.allclose(forecast, fc_ref, atol=1e-3, rtol=1e-2)

    print("KERNEL_OK")
</pallas_src>

<mosaic_0001>
module attributes {stable_mosaic.version = 11 : i64} {
  func.func @kernel(%arg0: i32, %arg1: memref<8x128xbf16, #tpu.memory_space<vmem>>, %arg2: memref<128x128xbf16, #tpu.memory_space<vmem>>, %arg3: memref<128x128xbf16, #tpu.memory_space<vmem>>, %arg4: memref<128x128xbf16, #tpu.memory_space<vmem>>, %arg5: memref<3x128xf32, #tpu.memory_space<vmem>>, %arg6: memref<128x128xbf16, #tpu.memory_space<vmem>>, %arg7: memref<8x128xf32, #tpu.memory_space<vmem>>) attributes {dimension_semantics = [#tpu.dimension_semantics<parallel>], iteration_bounds = array<i64: 1>, scalar_prefetch = 0 : i64, scratch_operands = 0 : i64, tpu.core_type = #tpu.core_type<tc>, window_params = [{transform_indices = @transform_0, window_bounds = array<i64: 8, 128>}, {pipeline_mode = #tpu.pipeline_mode<synchronous>, transform_indices = @transform_1, window_bounds = array<i64: 128, 128>}, {pipeline_mode = #tpu.pipeline_mode<synchronous>, transform_indices = @transform_2, window_bounds = array<i64: 128, 128>}, {pipeline_mode = #tpu.pipeline_mode<synchronous>, transform_indices = @transform_3, window_bounds = array<i64: 128, 128>}, {pipeline_mode = #tpu.pipeline_mode<synchronous>, transform_indices = @transform_4, window_bounds = array<i64: 3, 128>}, {pipeline_mode = #tpu.pipeline_mode<synchronous>, transform_indices = @transform_5, window_bounds = array<i64: 128, 128>}, {transform_indices = @transform_6, window_bounds = array<i64: 8, 128>}]} {
    %c0 = arith.constant 0 : index
    %c0_0 = arith.constant 0 : index
    %0 = vector.load %arg1[%c0, %c0_0] : memref<8x128xbf16, #tpu.memory_space<vmem>>, vector<8x128xbf16>
    %c0_1 = arith.constant 0 : index
    %c0_2 = arith.constant 0 : index
    %1 = vector.load %arg2[%c0_1, %c0_2] : memref<128x128xbf16, #tpu.memory_space<vmem>>, vector<128x128xbf16>
    %cst = arith.constant dense<0.000000e+00> : vector<8x128xf32>
    %2 = tpu.matmul %0, %1, %cst {dimension_numbers = #tpu.dot_dimension_numbers<[1], [0], [0], [1], [0, 0, 1, 1], [], []>} : vector<8x128xbf16>, vector<128x128xbf16>, vector<8x128xf32> -> vector<8x128xf32>
    %c0_3 = arith.constant 0 : index
    %c0_4 = arith.constant 0 : index
    %3 = vector.load %arg5[%c0_3, %c0_4] : memref<3x128xf32, #tpu.memory_space<vmem>>, vector<1x128xf32>
    %4 = vector.broadcast %3 : vector<1x128xf32> to vector<8x128xf32>
    %5 = arith.addf %2, %4 : vector<8x128xf32>
    %cst_5 = arith.constant 0.000000e+00 : f32
    %6 = vector.broadcast %cst_5 : f32 to vector<8x128xf32>
    %7 = arith.maximumf %5, %6 : vector<8x128xf32>
    %8 = arith.truncf %7 : vector<8x128xf32> to vector<8x128xbf16>
    %c0_6 = arith.constant 0 : index
    %c0_7 = arith.constant 0 : index
    %9 = vector.load %arg3[%c0_6, %c0_7] : memref<128x128xbf16, #tpu.memory_space<vmem>>, vector<128x128xbf16>
    %cst_8 = arith.constant dense<0.000000e+00> : vector<8x128xf32>
    %10 = tpu.matmul %8, %9, %cst_8 {dimension_numbers = #tpu.dot_dimension_numbers<[1], [0], [0], [1], [0, 0, 1, 1], [], []>} : vector<8x128xbf16>, vector<128x128xbf16>, vector<8x128xf32> -> vector<8x128xf32>
    %c1 = arith.constant 1 : index
    %c0_9 = arith.constant 0 : index
    %11 = vector.load %arg5[%c1, %c0_9] : memref<3x128xf32, #tpu.memory_space<vmem>>, vector<1x128xf32>
    %12 = vector.broadcast %11 : vector<1x128xf32> to vector<8x128xf32>
    %13 = arith.addf %10, %12 : vector<8x128xf32>
    %cst_10 = arith.constant 0.000000e+00 : f32
    %14 = vector.broadcast %cst_10 : f32 to vector<8x128xf32>
    %15 = arith.maximumf %13, %14 : vector<8x128xf32>
    %16 = arith.truncf %15 : vector<8x128xf32> to vector<8x128xbf16>
    %c0_11 = arith.constant 0 : index
    %c0_12 = arith.constant 0 : index
    %17 = vector.load %arg4[%c0_11, %c0_12] : memref<128x128xbf16, #tpu.memory_space<vmem>>, vector<128x128xbf16>
    %cst_13 = arith.constant dense<0.000000e+00> : vector<8x128xf32>
    %18 = tpu.matmul %16, %17, %cst_13 {dimension_numbers = #tpu.dot_dimension_numbers<[1], [0], [0], [1], [0, 0, 1, 1], [], []>} : vector<8x128xbf16>, vector<128x128xbf16>, vector<8x128xf32> -> vector<8x128xf32>
    %c2 = arith.constant 2 : index
    %c0_14 = arith.constant 0 : index
    %19 = vector.load %arg5[%c2, %c0_14] : memref<3x128xf32, #tpu.memory_space<vmem>>, vector<1x128xf32>
    %20 = vector.broadcast %19 : vector<1x128xf32> to vector<8x128xf32>
    %21 = arith.addf %18, %20 : vector<8x128xf32>
    %cst_15 = arith.constant 0.000000e+00 : f32
    %22 = vector.broadcast %cst_15 : f32 to vector<8x128xf32>
    %23 = arith.maximumf %21, %22 : vector<8x128xf32>
    %24 = arith.truncf %23 : vector<8x128xf32> to vector<8x128xbf16>
    %c0_16 = arith.constant 0 : index
    %c0_17 = arith.constant 0 : index
    %25 = vector.load %arg6[%c0_16, %c0_17] : memref<128x128xbf16, #tpu.memory_space<vmem>>, vector<128x128xbf16>
    %cst_18 = arith.constant dense<0.000000e+00> : vector<8x128xf32>
    %26 = tpu.matmul %24, %25, %cst_18 {dimension_numbers = #tpu.dot_dimension_numbers<[1], [0], [0], [1], [0, 0, 1, 1], [], []>} : vector<8x128xbf16>, vector<128x128xbf16>, vector<8x128xf32> -> vector<8x128xf32>
    %c0_19 = arith.constant 0 : index
    %c0_20 = arith.constant 0 : index
    %27 = vector.load %arg7[%c0_19, %c0_20] : memref<8x128xf32, #tpu.memory_space<vmem>>, vector<8x128xf32>
    tpu.vector_store %arg7[%c0_19, %c0_20], %26 {strides = array<i32>} : memref<8x128xf32, #tpu.memory_space<vmem>>, vector<8x128xf32>,
    return
  }
  func.func @transform_0(%arg0: i32) -> (i32, i32) {
    %c0_i32 = arith.constant 0 : i32
    %c0_i32_0 = arith.constant 0 : i32
    return %arg0, %c0_i32 : i32, i32
  }
  func.func @transform_1(%arg0: i32) -> (i32, i32) {
    %c0_i32 = arith.constant 0 : i32
    %c0_i32_0 = arith.constant 0 : i32
    %c0_i32_1 = arith.constant 0 : i32
    return %c0_i32, %c0_i32_0 : i32, i32
  }
  func.func @transform_2(%arg0: i32) -> (i32, i32) {
    %c0_i32 = arith.constant 0 : i32
    %c0_i32_0 = arith.constant 0 : i32
    %c0_i32_1 = arith.constant 0 : i32
    return %c0_i32, %c0_i32_0 : i32, i32
  }
  func.func @transform_3(%arg0: i32) -> (i32, i32) {
    %c0_i32 = arith.constant 0 : i32
    %c0_i32_0 = arith.constant 0 : i32
    %c0_i32_1 = arith.constant 0 : i32
    return %c0_i32, %c0_i32_0 : i32, i32
  }
  func.func @transform_4(%arg0: i32) -> (i32, i32) {
    %c0_i32 = arith.constant 0 : i32
    %c0_i32_0 = arith.constant 0 : i32
    %c0_i32_1 = arith.constant 0 : i32
    return %c0_i32, %c0_i32_0 : i32, i32
  }
  func.func @transform_5(%arg0: i32) -> (i32, i32) {
    %c0_i32 = arith.constant 0 : i32
    %c0_i32_0 = arith.constant 0 : i32
    %c0_i32_1 = arith.constant 0 : i32
    return %c0_i32, %c0_i32_0 : i32, i32
  }
  func.func @transform_6(%arg0: i32) -> (i32, i32) {
    %c0_i32 = arith.constant 0 : i32
    %c0_i32_0 = arith.constant 0 : i32
    return %arg0, %c0_i32 : i32, i32
  }
}

</mosaic_0001>

<llo_original>
// kernel: tpu_custom_call.1
$region0: #{tpu_custom_call.1}
  #allocation0 [shape = 'u32[]', space=smem, size = 0x4, offset = 0x4, fixed_abs, tag = 'smem constant byte address 0x4 - core index']
  #allocation1 [shape = 'u32[144,128]{1,0:T(1,128)}', space=vmem, size = 0x12000, scoped, tag = 'internal scratch']
  %s0 = inlined_call_operand.hbm [shape: bf16[8,128], index: 0, kind: input, shape index: {}]
  %s1 = inlined_call_operand.hbm [shape: bf16[128,128], index: 1, kind: input, shape index: {}]
  %s2 = inlined_call_operand.hbm [shape: bf16[128,128], index: 2, kind: input, shape index: {}]
  %s3 = inlined_call_operand.hbm [shape: bf16[128,128], index: 3, kind: input, shape index: {}]
  %s4 = inlined_call_operand.vmem [shape: f32[3,128], index: 4, kind: input, shape index: {}]
  %s5 = inlined_call_operand.hbm [shape: bf16[128,128], index: 5, kind: input, shape index: {}]
  %s6 = inlined_call_operand.hbm [shape: f32[8,128], index: 6, kind: output, shape index: {}]
  %s7 = sld [smem:[#allocation0]]
  $region54: #{tpu_custom_call.1} parent=0
    _
  %s9 = ssub.s32 1, %s7
  %s10 = scalar_select 0, %s9, %s7
  $region1: #{tpu_custom_call.1} parent=0
    #allocation2 [shape = 'u8[2048]{0}', space=vmem, size = 0x800, scoped, tag = 'input window, operand 0, single buffered']
    #allocation3 [shape = 's32[1]{0}', space=sflag, size = 0x4, scoped, tag = 'scoped memory for tpu_custom_call.1']
    #allocation4 [shape = 's32[1]{0}', space=sflag, size = 0x4, scoped, tag = 'scoped memory for tpu_custom_call.1']
    #allocation5 [shape = 'u8[32768]{0}', space=vmem, size = 0x8000, scoped, tag = 'input window, operand 1, single buffered']
    #allocation6 [shape = 's32[1]{0}', space=sflag, size = 0x4, scoped, tag = 'scoped memory for tpu_custom_call.1']
    #allocation7 [shape = 'u8[32768]{0}', space=vmem, size = 0x8000, scoped, tag = 'input window, operand 2, single buffered']
    #allocation8 [shape = 'u8[32768]{0}', space=vmem, size = 0x8000, scoped, tag = 'input window, operand 3, single buffered']
    #allocation9 [shape = 's32[1]{0}', space=sflag, size = 0x4, scoped, tag = 'scoped memory for tpu_custom_call.1']
    #allocation10 [shape = 'u8[32768]{0}', space=vmem, size = 0x8000, scoped, tag = 'input window, operand 5, single buffered']
    #allocation11 [shape = 'u8[4096]{0}', space=vmem, size = 0x1000, scoped, tag = 'output window, operand 0, single buffered']
    %11 = vsyncpa [#allocation3], 0
    %12 = vsyncpa [#allocation6], 0
    %13 = vsyncpa [#allocation9], 0
    %14 = vsyncpa [#allocation4], 0
    // Predicated region
    $region2: #{tpu_custom_call.1} parent=1 // pred_check
      _
    $region3: #{tpu_custom_call.1} parent=1 // pred_check_branch
      %16 = sbr.rel (0) target = $region5
    $region4: #{tpu_custom_call.1} parent=1 // pred_region
      %s18 = ssub.s32 64, 64
      %19 = vsyncadd [#allocation3], %s18
      %s21 = sshll.u32 [#allocation2], 4
      %s22 = int_to_ptr.vmem [resolvable:$true] %s21
      %24 = dma.hbm_to_vmem [thread:$0]  %s0, 64, %s22, [#allocation3]
    $region5: #{tpu_custom_call.1} parent=1 // pred_fallthru
      _
    // Predicated region
    $region6: #{tpu_custom_call.1} parent=1 // pred_check
      _
    $region7: #{tpu_custom_call.1} parent=1 // pred_check_branch
      %26 = sbr.rel (0) target = $region9
    $region8: #{tpu_custom_call.1} parent=1 // pred_region
      %s28 = ssub.s32 1024, 1024
      %29 = vsyncadd [#allocation6], %s28
      %s30 = sshll.u32 [#allocation5], 4
      %s31 = int_to_ptr.vmem [resolvable:$true] %s30
      %36 = dma.hbm_to_vmem [thread:$0]  %s1, 1024, %s31, [#allocation6], 64, 64, 4
    $region9: #{tpu_custom_call.1} parent=1 // pred_fallthru
      _
    // Predicated region
    $region10: #{tpu_custom_call.1} parent=1 // pred_check
      _
    $region11: #{tpu_custom_call.1} parent=1 // pred_check_branch
      %38 = sbr.rel (0) target = $region13
    $region12: #{tpu_custom_call.1} parent=1 // pred_region
      %s40 = ssub.s32 1024, 1024
      %41 = vsyncadd [#allocation6], %s40
      %s42 = sshll.u32 [#allocation7], 4
      %s43 = int_to_ptr.vmem [resolvable:$true] %s42
      %48 = dma.hbm_to_vmem [thread:$0]  %s2, 1024, %s43, [#allocation6], 64, 64, 4
    $region13: #{tpu_custom_call.1} parent=1 // pred_fallthru
      _
    // Predicated region
    $region14: #{tpu_custom_call.1} parent=1 // pred_check
      _
    $region15: #{tpu_custom_call.1} parent=1 // pred_check_branch
      %50 = sbr.rel (0) target = $region17
    $region16: #{tpu_custom_call.1} parent=1 // pred_region
      %s52 = ssub.s32 1024, 1024
      %53 = vsyncadd [#allocation9], %s52
      %s54 = sshll.u32 [#allocation8], 4
      %s55 = int_to_ptr.vmem [resolvable:$true] %s54
      %60 = dma.hbm_to_vmem [thread:$0]  %s3, 1024, %s55, [#allocation9], 64, 64, 4
    $region17: #{tpu_custom_call.1} parent=1 // pred_fallthru
      _
    // Predicated region
    $region18: #{tpu_custom_call.1} parent=1 // pred_check
      _
    $region19: #{tpu_custom_call.1} parent=1 // pred_check_branch
      %62 = sbr.rel (0) target = $region21
    $region20: #{tpu_custom_call.1} parent=1 // pred_region
      _
    $region21: #{tpu_custom_call.1} parent=1 // pred_fallthru
      _
    // Predicated region
    $region22: #{tpu_custom_call.1} parent=1 // pred_check
      _
    $region23: #{tpu_custom_call.1} parent=1 // pred_check_branch
      %64 = sbr.rel (0) target = $region25
    $region24: #{tpu_custom_call.1} parent=1 // pred_region
      %s66 = ssub.s32 1024, 1024
      %67 = vsyncadd [#allocation9], %s66
      %s68 = sshll.u32 [#allocation10], 4
      %s69 = int_to_ptr.vmem [resolvable:$true] %s68
      %74 = dma.hbm_to_vmem [thread:$0]  %s5, 1024, %s69, [#allocation9], 64, 64, 4
    $region25: #{tpu_custom_call.1} parent=1 // pred_fallthru
      _
    // Predicated region
    $region26: #{tpu_custom_call.1} parent=1 // pred_check
      _
    $region27: #{tpu_custom_call.1} parent=1 // pred_check_branch
      %76 = sbr.rel (0) target = $region29
    $region28: #{tpu_custom_call.1} parent=1 // pred_region
      %77 = dma.done [#allocation3], 64
    $region29: #{tpu_custom_call.1} parent=1 // pred_fallthru
      _
    // Predicated region
    $region30: #{tpu_custom_call.1} parent=1 // pred_check
      _
    $region31: #{tpu_custom_call.1} parent=1 // pred_check_branch
      %79 = sbr.rel (0) target = $region33
    $region32: #{tpu_custom_call.1} parent=1 // pred_region
      %80 = dma.done [#allocation6], 1024
    $region33: #{tpu_custom_call.1} parent=1 // pred_fallthru
      _
    // Predicated region
    $region34: #{tpu_custom_call.1} parent=1 // pred_check
      _
    $region35: #{tpu_custom_call.1} parent=1 // pred_check_branch
      %82 = sbr.rel (0) target = $region37
    $region36: #{tpu_custom_call.1} parent=1 // pred_region
      %83 = dma.done [#allocation6], 1024
    $region37: #{tpu_custom_call.1} parent=1 // pred_fallthru
      _
    // Predicated region
    $region38: #{tpu_custom_call.1} parent=1 // pred_check
      _
    $region39: #{tpu_custom_call.1} parent=1 // pred_check_branch
      %85 = sbr.rel (0) target = $region41
    $region40: #{tpu_custom_call.1} parent=1 // pred_region
      %86 = dma.done [#allocation9], 1024
    $region41: #{tpu_custom_call.1} parent=1 // pred_fallthru
      _
    // Predicated region
    $region42: #{tpu_custom_call.1} parent=1 // pred_check
      _
    $region43: #{tpu_custom_call.1} parent=1 // pred_check_branch
      %88 = sbr.rel (0) target = $region45
    $region44: #{tpu_custom_call.1} parent=1 // pred_region
      %89 = dma.done [#allocation9], 1024
    $region45: #{tpu_custom_call.1} parent=1 // pred_fallthru
      _
    %v91 = vld [vmem:[#allocation2] sm:$0xf]
    %v92 = vld [vmem:[#allocation5] sm:$0xf]
    %v93 = vld [vmem:[#allocation5 + $0x4] sm:$0xf]
    %v94 = vld [vmem:[#allocation5 + $0x8] sm:$0xf]
    %v95 = vld [vmem:[#allocation5 + $0xc] sm:$0xf]
    %v96 = vld [vmem:[#allocation5 + $0x10] sm:$0xf]
    %v97 = vld [vmem:[#allocation5 + $0x14] sm:$0xf]
    %v98 = vld [vmem:[#allocation5 + $0x18] sm:$0xf]
    %v99 = vld [vmem:[#allocation5 + $0x1c] sm:$0xf]
    %v100 = vld [vmem:[#allocation5 + $0x20] sm:$0xf]
    %v101 = vld [vmem:[#allocation5 + $0x24] sm:$0xf]
    %v102 = vld [vmem:[#allocation5 + $0x28] sm:$0xf]
    %v103 = vld [vmem:[#allocation5 + $0x2c] sm:$0xf]
    %v104 = vld [vmem:[#allocation5 + $0x30] sm:$0xf]
    %v105 = vld [vmem:[#allocation5 + $0x34] sm:$0xf]
    %v106 = vld [vmem:[#allocation5 + $0x38] sm:$0xf]
    %v107 = vld [vmem:[#allocation5 + $0x3c] sm:$0xf]
    %v108 = vld [vmem:[%s4] sm:$0x1]
    %v109 = vlaneseq
    %v110 = vshrl.u32 %v109, 7
    %v111 = vsub.s32 0, %v110
    %v112 = vrot.slane %v108, %v111
    %v129 = vunpack.c.l.b16 %v92
    %v130 = vunpack.c.l.b16 %v93
    %v131 = vunpack.c.l.b16 %v94
    %v132 = vunpack.c.l.b16 %v95
    %v133 = vunpack.c.l.b16 %v96
    %v134 = vunpack.c.l.b16 %v97
    %v135 = vunpack.c.l.b16 %v98
    %v136 = vunpack.c.l.b16 %v99
    %v137 = vunpack.c.l.b16 %v100
    %v138 = vunpack.c.l.b16 %v101
    %v139 = vunpack.c.l.b16 %v102
    %v140 = vunpack.c.l.b16 %v103
    %v141 = vunpack.c.l.b16 %v104
    %v142 = vunpack.c.l.b16 %v105
    %v143 = vunpack.c.l.b16 %v106
    %v144 = vunpack.c.l.b16 %v107
    %v145 = vpack.c.b16 %v130, %v129
    %v146 = vpack.c.b16 %v132, %v131
    %v147 = vpack.c.b16 %v134, %v133
    %v148 = vpack.c.b16 %v136, %v135
    %v149 = vpack.c.b16 %v138, %v137
    %v150 = vpack.c.b16 %v140, %v139
    %v151 = vpack.c.b16 %v142, %v141
    %v152 = vpack.c.b16 %v144, %v143
    %161 = vmatprep.subr.bf16.mxu0 0
    %162 = vmatpush1.bf16.msra.mxu0 %v145
    %163 = vmatprep.subr.bf16.mxu0 0
    %164 = vmatpush1.bf16.msra.mxu0 %v146
    %165 = vmatprep.subr.bf16.mxu0 0
    %166 = vmatpush1.bf16.msra.mxu0 %v147
    %167 = vmatprep.subr.bf16.mxu0 0
    %168 = vmatpush1.bf16.msra.mxu0 %v148
    %169 = vmatprep.subr.bf16.mxu0 0
    %170 = vmatpush1.bf16.msra.mxu0 %v149
    %171 = vmatprep.subr.bf16.mxu0 0
    %172 = vmatpush1.bf16.msra.mxu0 %v150
    %173 = vmatprep.subr.bf16.mxu0 0
    %174 = vmatpush1.bf16.msra.mxu0 %v151
    %175 = vmatprep.subr.bf16.mxu0 0
    %176 = vmatpush1.bf16.msra.mxu0 %v152
    %177 = vmatprep.subr.bf16.mxu0 0
    %178 = vmatpush1.bf16.msra.mxu0 0
    %179 = vmatprep.subr.bf16.mxu0 0
    %180 = vmatpush1.bf16.msra.mxu0 0
    %181 = vmatprep.subr.bf16.mxu0 0
    %182 = vmatpush1.bf16.msra.mxu0 0
    %183 = vmatprep.subr.bf16.mxu0 0
    %184 = vmatpush1.bf16.msra.mxu0 0
    %185 = vmatprep.subr.bf16.mxu0 0
    %186 = vmatpush1.bf16.msra.mxu0 0
    %187 = vmatprep.subr.bf16.mxu0 0
    %188 = vmatpush1.bf16.msra.mxu0 0
    %189 = vmatprep.subr.bf16.mxu0 0
    %190 = vmatpush1.bf16.msra.mxu0 0
    %191 = vmatprep.subr.bf16.mxu0 0
    %192 = vmatpush1.bf16.msra.mxu0 0
    %193 = vmatprep.mubr.bf16.mxu0 0
    %194 = vmatmul.mubr.bf16.gmra.mrb[0].mxu0 %v91
    %v195 = vpop.f32.mrb[0].mxu0
    %v196 = vadd.f32 %v112, %v195
    %v197 = vpop.f32.mrb[0].mxu0
    %v198 = vpop.f32.mrb[0].mxu0
    %v199 = vpop.f32.mrb[0].mxu0
    %200 = vdwg.mxu0
    %v201 = vmax.f32 %v196, 0.0
    %v202 = vpack.c.bf16 %v201, %v201
    %v203 = vld [vmem:[#allocation7] sm:$0xf]
    %v204 = vld [vmem:[#allocation7 + $0x4] sm:$0xf]
    %v205 = vld [vmem:[#allocation7 + $0x8] sm:$0xf]
    %v206 = vld [vmem:[#allocation7 + $0xc] sm:$0xf]
    %v207 = vld [vmem:[#allocation7 + $0x10] sm:$0xf]
    %v208 = vld [vmem:[#allocation7 + $0x14] sm:$0xf]
    %v209 = vld [vmem:[#allocation7 + $0x18] sm:$0xf]
    %v210 = vld [vmem:[#allocation7 + $0x1c] sm:$0xf]
    %v211 = vld [vmem:[#allocation7 + $0x20] sm:$0xf]
    %v212 = vld [vmem:[#allocation7 + $0x24] sm:$0xf]
    %v213 = vld [vmem:[#allocation7 + $0x28] sm:$0xf]
    %v214 = vld [vmem:[#allocation7 + $0x2c] sm:$0xf]
    %v215 = vld [vmem:[#allocation7 + $0x30] sm:$0xf]
    %v216 = vld [vmem:[#allocation7 + $0x34] sm:$0xf]
    %v217 = vld [vmem:[#allocation7 + $0x38] sm:$0xf]
    %v218 = vld [vmem:[#allocation7 + $0x3c] sm:$0xf]
    %v219 = vld [vmem:[%s4 + $0x1] sm:$0x1]
    %v220 = vlaneseq
    %v221 = vshrl.u32 %v220, 7
    %v222 = vsub.s32 0, %v221
    %v223 = vrot.slane %v219, %v222
    %v240 = vunpack.c.l.b16 %v203
    %v241 = vunpack.c.l.b16 %v204
    %v242 = vunpack.c.l.b16 %v205
    %v243 = vunpack.c.l.b16 %v206
    %v244 = vunpack.c.l.b16 %v207
    %v245 = vunpack.c.l.b16 %v208
    %v246 = vunpack.c.l.b16 %v209
    %v247 = vunpack.c.l.b16 %v210
    %v248 = vunpack.c.l.b16 %v211
    %v249 = vunpack.c.l.b16 %v212
    %v250 = vunpack.c.l.b16 %v213
    %v251 = vunpack.c.l.b16 %v214
    %v252 = vunpack.c.l.b16 %v215
    %v253 = vunpack.c.l.b16 %v216
    %v254 = vunpack.c.l.b16 %v217
    %v255 = vunpack.c.l.b16 %v218
    %v256 = vpack.c.b16 %v241, %v240
    %v257 = vpack.c.b16 %v243, %v242
    %v258 = vpack.c.b16 %v245, %v244
    %v259 = vpack.c.b16 %v247, %v246
    %v260 = vpack.c.b16 %v249, %v248
    %v261 = vpack.c.b16 %v251, %v250
    %v262 = vpack.c.b16 %v253, %v252
    %v263 = vpack.c.b16 %v255, %v254
    %272 = vmatprep.subr.bf16.mxu0 0
    %273 = vmatpush1.bf16.msra.mxu0 %v256
    %274 = vmatprep.subr.bf16.mxu0 0
    %275 = vmatpush1.bf16.msra.mxu0 %v257
    %276 = vmatprep.subr.bf16.mxu0 0
    %277 = vmatpush1.bf16.msra.mxu0 %v258
    %278 = vmatprep.subr.bf16.mxu0 0
    %279 = vmatpush1.bf16.msra.mxu0 %v259
    %280 = vmatprep.subr.bf16.mxu0 0
    %281 = vmatpush1.bf16.msra.mxu0 %v260
    %282 = vmatprep.subr.bf16.mxu0 0
    %283 = vmatpush1.bf16.msra.mxu0 %v261
    %284 = vmatprep.subr.bf16.mxu0 0
    %285 = vmatpush1.bf16.msra.mxu0 %v262
    %286 = vmatprep.subr.bf16.mxu0 0
    %287 = vmatpush1.bf16.msra.mxu0 %v263
    %288 = vmatprep.subr.bf16.mxu0 0
    %289 = vmatpush1.bf16.msra.mxu0 0
    %290 = vmatprep.subr.bf16.mxu0 0
    %291 = vmatpush1.bf16.msra.mxu0 0
    %292 = vmatprep.subr.bf16.mxu0 0
    %293 = vmatpush1.bf16.msra.mxu0 0
    %294 = vmatprep.subr.bf16.mxu0 0
    %295 = vmatpush1.bf16.msra.mxu0 0
    %296 = vmatprep.subr.bf16.mxu0 0
    %297 = vmatpush1.bf16.msra.mxu0 0
    %298 = vmatprep.subr.bf16.mxu0 0
    %299 = vmatpush1.bf16.msra.mxu0 0
    %300 = vmatprep.subr.bf16.mxu0 0
    %301 = vmatpush1.bf16.msra.mxu0 0
    %302 = vmatprep.subr.bf16.mxu0 0
    %303 = vmatpush1.bf16.msra.mxu0 0
    %304 = vmatprep.mubr.bf16.mxu0 0
    %305 = vmatmul.mubr.bf16.gmra.mrb[0].mxu0 %v202
    %v306 = vpop.f32.mrb[0].mxu0
    %v307 = vadd.f32 %v223, %v306
    %v308 = vpop.f32.mrb[0].mxu0
    %v309 = vpop.f32.mrb[0].mxu0
    %v310 = vpop.f32.mrb[0].mxu0
    %311 = vdwg.mxu0
    %v312 = vmax.f32 %v307, 0.0
    %v313 = vpack.c.bf16 %v312, %v312
    %v314 = vld [vmem:[#allocation8] sm:$0xf]
    %v315 = vld [vmem:[#allocation8 + $0x4] sm:$0xf]
    %v316 = vld [vmem:[#allocation8 + $0x8] sm:$0xf]
    %v317 = vld [vmem:[#allocation8 + $0xc] sm:$0xf]
    %v318 = vld [vmem:[#allocation8 + $0x10] sm:$0xf]
    %v319 = vld [vmem:[#allocation8 + $0x14] sm:$0xf]
    %v320 = vld [vmem:[#allocation8 + $0x18] sm:$0xf]
    %v321 = vld [vmem:[#allocation8 + $0x1c] sm:$0xf]
    %v322 = vld [vmem:[#allocation8 + $0x20] sm:$0xf]
    %v323 = vld [vmem:[#allocation8 + $0x24] sm:$0xf]
    %v324 = vld [vmem:[#allocation8 + $0x28] sm:$0xf]
    %v325 = vld [vmem:[#allocation8 + $0x2c] sm:$0xf]
    %v326 = vld [vmem:[#allocation8 + $0x30] sm:$0xf]
    %v327 = vld [vmem:[#allocation8 + $0x34] sm:$0xf]
    %v328 = vld [vmem:[#allocation8 + $0x38] sm:$0xf]
    %v329 = vld [vmem:[#allocation8 + $0x3c] sm:$0xf]
    %v330 = vld [vmem:[%s4 + $0x2] sm:$0x1]
    %v331 = vlaneseq
    %v332 = vshrl.u32 %v331, 7
    %v333 = vsub.s32 0, %v332
    %v334 = vrot.slane %v330, %v333
    %v351 = vunpack.c.l.b16 %v314
    %v352 = vunpack.c.l.b16 %v315
    %v353 = vunpack.c.l.b16 %v316
    %v354 = vunpack.c.l.b16 %v317
    %v355 = vunpack.c.l.b16 %v318
    %v356 = vunpack.c.l.b16 %v319
    %v357 = vunpack.c.l.b16 %v320
    %v358 = vunpack.c.l.b16 %v321
    %v359 = vunpack.c.l.b16 %v322
    %v360 = vunpack.c.l.b16 %v323
    %v361 = vunpack.c.l.b16 %v324
    %v362 = vunpack.c.l.b16 %v325
    %v363 = vunpack.c.l.b16 %v326
    %v364 = vunpack.c.l.b16 %v327
    %v365 = vunpack.c.l.b16 %v328
    %v366 = vunpack.c.l.b16 %v329
    %v367 = vpack.c.b16 %v352, %v351
    %v368 = vpack.c.b16 %v354, %v353
    %v369 = vpack.c.b16 %v356, %v355
    %v370 = vpack.c.b16 %v358, %v357
    %v371 = vpack.c.b16 %v360, %v359
    %v372 = vpack.c.b16 %v362, %v361
    %v373 = vpack.c.b16 %v364, %v363
    %v374 = vpack.c.b16 %v366, %v365
    %383 = vmatprep.subr.bf16.mxu0 0
    %384 = vmatpush1.bf16.msra.mxu0 %v367
    %385 = vmatprep.subr.bf16.mxu0 0
    %386 = vmatpush1.bf16.msra.mxu0 %v368
    %387 = vmatprep.subr.bf16.mxu0 0
    %388 = vmatpush1.bf16.msra.mxu0 %v369
    %389 = vmatprep.subr.bf16.mxu0 0
    %390 = vmatpush1.bf16.msra.mxu0 %v370
    %391 = vmatprep.subr.bf16.mxu0 0
    %392 = vmatpush1.bf16.msra.mxu0 %v371
    %393 = vmatprep.subr.bf16.mxu0 0
    %394 = vmatpush1.bf16.msra.mxu0 %v372
    %395 = vmatprep.subr.bf16.mxu0 0
    %396 = vmatpush1.bf16.msra.mxu0 %v373
    %397 = vmatprep.subr.bf16.mxu0 0
    %398 = vmatpush1.bf16.msra.mxu0 %v374
    %399 = vmatprep.subr.bf16.mxu0 0
    %400 = vmatpush1.bf16.msra.mxu0 0
    %401 = vmatprep.subr.bf16.mxu0 0
    %402 = vmatpush1.bf16.msra.mxu0 0
    %403 = vmatprep.subr.bf16.mxu0 0
    %404 = vmatpush1.bf16.msra.mxu0 0
    %405 = vmatprep.subr.bf16.mxu0 0
    %406 = vmatpush1.bf16.msra.mxu0 0
    %407 = vmatprep.subr.bf16.mxu0 0
    %408 = vmatpush1.bf16.msra.mxu0 0
    %409 = vmatprep.subr.bf16.mxu0 0
    %410 = vmatpush1.bf16.msra.mxu0 0
    %411 = vmatprep.subr.bf16.mxu0 0
    %412 = vmatpush1.bf16.msra.mxu0 0
    %413 = vmatprep.subr.bf16.mxu0 0
    %414 = vmatpush1.bf16.msra.mxu0 0
    %415 = vmatprep.mubr.bf16.mxu0 0
    %416 = vmatmul.mubr.bf16.gmra.mrb[0].mxu0 %v313
    %v417 = vpop.f32.mrb[0].mxu0
    %v418 = vadd.f32 %v334, %v417
    %v419 = vpop.f32.mrb[0].mxu0
    %v420 = vpop.f32.mrb[0].mxu0
    %v421 = vpop.f32.mrb[0].mxu0
    %422 = vdwg.mxu0
    %v423 = vmax.f32 %v418, 0.0
    %v424 = vpack.c.bf16 %v423, %v423
    %v425 = vld [vmem:[#allocation10] sm:$0xf]
    %v426 = vld [vmem:[#allocation10 + $0x4] sm:$0xf]
    %v427 = vld [vmem:[#allocation10 + $0x8] sm:$0xf]
    %v428 = vld [vmem:[#allocation10 + $0xc] sm:$0xf]
    %v429 = vld [vmem:[#allocation10 + $0x10] sm:$0xf]
    %v430 = vld [vmem:[#allocation10 + $0x14] sm:$0xf]
    %v431 = vld [vmem:[#allocation10 + $0x18] sm:$0xf]
    %v432 = vld [vmem:[#allocation10 + $0x1c] sm:$0xf]
    %v433 = vld [vmem:[#allocation10 + $0x20] sm:$0xf]
    %v434 = vld [vmem:[#allocation10 + $0x24] sm:$0xf]
    %v435 = vld [vmem:[#allocation10 + $0x28] sm:$0xf]
    %v436 = vld [vmem:[#allocation10 + $0x2c] sm:$0xf]
    %v437 = vld [vmem:[#allocation10 + $0x30] sm:$0xf]
    %v438 = vld [vmem:[#allocation10 + $0x34] sm:$0xf]
    %v439 = vld [vmem:[#allocation10 + $0x38] sm:$0xf]
    %v440 = vld [vmem:[#allocation10 + $0x3c] sm:$0xf]
    %v457 = vunpack.c.l.b16 %v425
    %v458 = vunpack.c.l.b16 %v426
    %v459 = vunpack.c.l.b16 %v427
    %v460 = vunpack.c.l.b16 %v428
    %v461 = vunpack.c.l.b16 %v429
    %v462 = vunpack.c.l.b16 %v430
    %v463 = vunpack.c.l.b16 %v431
    %v464 = vunpack.c.l.b16 %v432
    %v465 = vunpack.c.l.b16 %v433
    %v466 = vunpack.c.l.b16 %v434
    %v467 = vunpack.c.l.b16 %v435
    %v468 = vunpack.c.l.b16 %v436
    %v469 = vunpack.c.l.b16 %v437
    %v470 = vunpack.c.l.b16 %v438
    %v471 = vunpack.c.l.b16 %v439
    %v472 = vunpack.c.l.b16 %v440
    %v473 = vpack.c.b16 %v458, %v457
    %v474 = vpack.c.b16 %v460, %v459
    %v475 = vpack.c.b16 %v462, %v461
    %v476 = vpack.c.b16 %v464, %v463
    %v477 = vpack.c.b16 %v466, %v465
    %v478 = vpack.c.b16 %v468, %v467
    %v479 = vpack.c.b16 %v470, %v469
    %v480 = vpack.c.b16 %v472, %v471
    %489 = vmatprep.subr.bf16.mxu0 0
    %490 = vmatpush1.bf16.msra.mxu0 %v473
    %491 = vmatprep.subr.bf16.mxu0 0
    %492 = vmatpush1.bf16.msra.mxu0 %v474
    %493 = vmatprep.subr.bf16.mxu0 0
    %494 = vmatpush1.bf16.msra.mxu0 %v475
    %495 = vmatprep.subr.bf16.mxu0 0
    %496 = vmatpush1.bf16.msra.mxu0 %v476
    %497 = vmatprep.subr.bf16.mxu0 0
    %498 = vmatpush1.bf16.msra.mxu0 %v477
    %499 = vmatprep.subr.bf16.mxu0 0
    %500 = vmatpush1.bf16.msra.mxu0 %v478
    %501 = vmatprep.subr.bf16.mxu0 0
    %502 = vmatpush1.bf16.msra.mxu0 %v479
    %503 = vmatprep.subr.bf16.mxu0 0
    %504 = vmatpush1.bf16.msra.mxu0 %v480
    %505 = vmatprep.subr.bf16.mxu0 0
    %506 = vmatpush1.bf16.msra.mxu0 0
    %507 = vmatprep.subr.bf16.mxu0 0
    %508 = vmatpush1.bf16.msra.mxu0 0
    %509 = vmatprep.subr.bf16.mxu0 0
    %510 = vmatpush1.bf16.msra.mxu0 0
    %511 = vmatprep.subr.bf16.mxu0 0
    %512 = vmatpush1.bf16.msra.mxu0 0
    %513 = vmatprep.subr.bf16.mxu0 0
    %514 = vmatpush1.bf16.msra.mxu0 0
    %515 = vmatprep.subr.bf16.mxu0 0
    %516 = vmatpush1.bf16.msra.mxu0 0
    %517 = vmatprep.subr.bf16.mxu0 0
    %518 = vmatpush1.bf16.msra.mxu0 0
    %519 = vmatprep.subr.bf16.mxu0 0
    %520 = vmatpush1.bf16.msra.mxu0 0
    %521 = vmatprep.mubr.bf16.mxu0 0
    %522 = vmatmul.mubr.bf16.gmra.mrb[0].mxu0 %v424
    %v523 = vpop.f32.mrb[0].mxu0
    %v524 = vadd.f32 0.0, %v523
    %v525 = vpop.f32.mrb[0].mxu0
    %v526 = vpop.f32.mrb[0].mxu0
    %v527 = vpop.f32.mrb[0].mxu0
    %528 = vdwg.mxu0
    %529 = vst [vmem:[#allocation11] sm:$0xff] %v524
    // Predicated region
    $region46: #{tpu_custom_call.1} parent=1 // pred_check
      _
    $region47: #{tpu_custom_call.1} parent=1 // pred_check_branch
      %531 = sbr.rel (0) target = $region49
    $region48: #{tpu_custom_call.1} parent=1 // pred_region
      %s533 = ssub.s32 128, 128
      %534 = vsyncadd [#allocation4], %s533
      %s536 = sshll.u32 [#allocation11], 4
      %s537 = int_to_ptr.vmem [resolvable:$true] %s536
      %539 = dma.vmem_to_hbm [thread:$0]  %s537, 128, %s6, [#allocation4]
    $region49: #{tpu_custom_call.1} parent=1 // pred_fallthru
      _
    // Predicated region
    $region50: #{tpu_custom_call.1} parent=1 // pred_check
      _
    $region51: #{tpu_custom_call.1} parent=1 // pred_check_branch
      %541 = sbr.rel (0) target = $region53
    $region52: #{tpu_custom_call.1} parent=1 // pred_region
      %542 = dma.done [#allocation4], 128
    $region53: #{tpu_custom_call.1} parent=1 // pred_fallthru
      _
    %543 = vsyncpa [#allocation3], 1
    %544 = vsyncpa [#allocation6], 1
    %545 = vsyncpa [#allocation9], 1
    %546 = vsyncpa [#allocation4], 1

</llo_original>
